<compile_context>
chip_gen: v7x
topology: tpu7x:2x2x1
jax: 0.10.0
libtpu: 0.0.40
codegen_flags: <defaults>
</compile_context>

<pallas_src>
import functools

import jax
import jax.numpy as jnp
from jax.experimental import pallas as pl
from jax.experimental.pallas import tpu as pltpu


# ----------------------------- helpers -----------------------------------------
def _round_up(x, m):
    return -(-x // m) * m


def _pick_tk(cols, row_block):
    """Contraction (H*W) tile size.

    One exact full-width block when the 128-padded width fits 2048 lanes,
    otherwise the largest tile (2048 preferred, minimum 512) that keeps a
    (row_block, tk) f32 operand tile around <= 2 MiB per pipeline buffer.
    Ragged tail blocks are masked in-kernel (no wrapper jnp.pad copy, and the
    DMA never reads past the array edge so the overhang costs no HBM bytes).
    """
    if _round_up(cols, 128) <= 2048:
        return cols
    cap = max(512, ((2 << 20) // (row_block * 4)) // 128 * 128)
    return min(2048, cap)


# ----------------------------- Gram matrix kernels ------------------------------
def _gram_kernel(x_ref, o_ref, *, scale, cols, tk, ragged):
    """Simple path: accumulate the full Gram in the resident output block."""
    k = pl.program_id(0)

    @pl.when(k == 0)
    def _():
        o_ref[...] = jnp.zeros_like(o_ref)

    x = x_ref[...]  # native dtype straight to the MXU, f32 accumulate
    if ragged:  # zero the garbage columns of the overhanging last block
        cid = k * tk + jax.lax.broadcasted_iota(jnp.int32, x.shape, 1)
        x = jnp.where(cid < cols, x, jnp.zeros_like(x))
    o_ref[...] += jax.lax.dot_general(
        x, x, (((1,), (1,)), ((), ())), preferred_element_type=jnp.float32)

    @pl.when(k == pl.num_programs(0) - 1)
    def _():
        o_ref[...] = o_ref[...] * scale


def _gram_tiled_kernel(xi_ref, xj_ref, o_ref, *, scale, cols, tk, ragged):
    """Output-tiled path: (i, j) output tiles are megacore-parallel, k reduces."""
    k = pl.program_id(2)

    @pl.when(k == 0)
    def _():
        o_ref[...] = jnp.zeros_like(o_ref)

    xi = xi_ref[...]
    xj = xj_ref[...]
    if ragged:
        cid = k * tk + jax.lax.broadcasted_iota(jnp.int32, xi.shape, 1)
        m = cid < cols
        xi = jnp.where(m, xi, jnp.zeros_like(xi))
        xj = jnp.where(m, xj, jnp.zeros_like(xj))
    o_ref[...] += jax.lax.dot_general(
        xi, xj, (((1,), (1,)), ((), ())), preferred_element_type=jnp.float32)

    @pl.when(k == pl.num_programs(2) - 1)
    def _():
        o_ref[...] = o_ref[...] * scale


def gram_matrix_pallas(x):
    """x: (N, C, H, W) -> (N*C, N*C) float32 Gram matrix / (N*C*H*W)."""
    n, c, h, w = x.shape
    rows, cols = n * c, h * w
    feats = x.reshape(rows, cols)          # contiguous view, no copy
    scale = 1.0 / float(rows * cols)       # matches torch: G.div(a*b*c*d)

    if rows >= 256 and rows % 128 == 0:
        # Output-tiled: both v7x TensorCores share (i, j) tiles; per-core
        # resident block is only (tb, tb) (v7x has half the VMEM of v6e).
        tb = 256 if rows % 256 == 0 else 128
        tk = _pick_tk(cols, tb)
        nk = -(-cols // tk)
        kernel = functools.partial(
            _gram_tiled_kernel, scale=scale, cols=cols, tk=tk,
            ragged=(cols % tk) != 0)
        return pl.pallas_call(
            kernel,
            out_shape=jax.ShapeDtypeStruct((rows, rows), jnp.float32),
            grid_spec=pl.GridSpec(
                grid=(rows // tb, rows // tb, nk),
                in_specs=[
                    pl.BlockSpec((tb, tk), lambda i, j, k: (i, k)),
                    pl.BlockSpec((tb, tk), lambda i, j, k: (j, k)),
                ],
                out_specs=pl.BlockSpec((tb, tb), lambda i, j, k: (i, j)),
            ),
            compiler_params=pltpu.CompilerParams(
                dimension_semantics=("parallel", "parallel", "arbitrary")),
        )(feats, feats)

    tk = _pick_tk(cols, rows)
    nk = -(-cols // tk)
    kernel = functools.partial(
        _gram_kernel, scale=scale, cols=cols, tk=tk, ragged=(cols % tk) != 0)
    return pl.pallas_call(
        kernel,
        out_shape=jax.ShapeDtypeStruct((rows, rows), jnp.float32),
        grid_spec=pl.GridSpec(
            grid=(nk,),
            in_specs=[pl.BlockSpec((rows, tk), lambda k: (0, k))],
            out_specs=pl.BlockSpec((rows, rows), lambda k: (0, 0)),
        ),
        compiler_params=pltpu.CompilerParams(dimension_semantics=("arbitrary",)),
    )(feats)


# -------------------- fused Gram + MSE-vs-target-Gram kernels -------------------
def _gram_mse_kernel(x_ref, gt_ref, o_ref, acc_ref,
                     *, scale, inv_count, cols, tk, ragged):
    k = pl.program_id(0)

    @pl.when(k == 0)
    def _():
        acc_ref[...] = jnp.zeros_like(acc_ref)

    x = x_ref[...]
    if ragged:
        cid = k * tk + jax.lax.broadcasted_iota(jnp.int32, x.shape, 1)
        x = jnp.where(cid < cols, x, jnp.zeros_like(x))
    acc_ref[...] += jax.lax.dot_general(
        x, x, (((1,), (1,)), ((), ())), preferred_element_type=jnp.float32)

    @pl.when(k == pl.num_programs(0) - 1)
    def _():
        d = acc_ref[...] * scale - gt_ref[...]
        o_ref[0, 0] = jnp.sum(d * d) * inv_count


def _gram_mse_tiled_kernel(xi_ref, xj_ref, gt_ref, o_ref, acc_ref,
                           *, scale, cols, tk, ragged):
    k = pl.program_id(2)

    @pl.when(k == 0)
    def _():
        acc_ref[...] = jnp.zeros_like(acc_ref)

    xi = xi_ref[...]
    xj = xj_ref[...]
    if ragged:
        cid = k * tk + jax.lax.broadcasted_iota(jnp.int32, xi.shape, 1)
        m = cid < cols
        xi = jnp.where(m, xi, jnp.zeros_like(xi))
        xj = jnp.where(m, xj, jnp.zeros_like(xj))
    acc_ref[...] += jax.lax.dot_general(
        xi, xj, (((1,), (1,)), ((), ())), preferred_element_type=jnp.float32)

    @pl.when(k == pl.num_programs(2) - 1)
    def _():
        d = acc_ref[...] * scale - gt_ref[...]
        # Broadcast the per-(i,j) partial SSE across a standard (8,128) VMEM
        # output block (keeps lane/sublane-legal tiling and is megacore-safe);
        # the wrapper sums all partial blocks and divides by 8*128.
        o_ref[...] = jnp.zeros_like(o_ref) + jnp.sum(d * d)


def gram_mse_pallas(x, g_target):
    """scalar float32: mse(gram(x), g_target), Gram + MSE fused per layer."""
    n, c, h, w = x.shape
    rows, cols = n * c, h * w
    feats = x.reshape(rows, cols)
    scale = 1.0 / float(rows * cols)
    inv_count = 1.0 / float(rows * rows)

    if rows >= 256 and rows % 128 == 0:
        tb = 256 if rows % 256 == 0 else 128
        tk = _pick_tk(cols, tb)
        nk = -(-cols // tk)
        ni = rows // tb
        kernel = functools.partial(
            _gram_mse_tiled_kernel, scale=scale, cols=cols, tk=tk,
            ragged=(cols % tk) != 0)
        partial_sse = pl.pallas_call(
            kernel,
            out_shape=jax.ShapeDtypeStruct((ni * 8, ni * 128), jnp.float32),
            grid_spec=pl.GridSpec(
                grid=(ni, ni, nk),
                in_specs=[
                    pl.BlockSpec((tb, tk), lambda i, j, k: (i, k)),
                    pl.BlockSpec((tb, tk), lambda i, j, k: (j, k)),
                    pl.BlockSpec((tb, tb), lambda i, j, k: (i, j)),
                ],
                out_specs=pl.BlockSpec((8, 128), lambda i, j, k: (i, j)),
                scratch_shapes=[pltpu.VMEM((tb, tb), jnp.float32)],
            ),
            compiler_params=pltpu.CompilerParams(
                dimension_semantics=("parallel", "parallel", "arbitrary")),
        )(feats, feats, g_target)
        return jnp.sum(partial_sse) * (inv_count / (8.0 * 128.0))

    tk = _pick_tk(cols, rows)
    nk = -(-cols // tk)
    kernel = functools.partial(
        _gram_mse_kernel, scale=scale, inv_count=inv_count, cols=cols, tk=tk,
        ragged=(cols % tk) != 0)
    out = pl.pallas_call(
        kernel,
        out_shape=jax.ShapeDtypeStruct((1, 1), jnp.float32),
        grid_spec=pl.GridSpec(
            grid=(nk,),
            in_specs=[
                pl.BlockSpec((rows, tk), lambda k: (0, k)),
                pl.BlockSpec((rows, rows), lambda k: (0, 0)),
            ],
            out_specs=pl.BlockSpec(
                (1, 1), lambda k: (0, 0), memory_space=pltpu.MemorySpace.SMEM),
            scratch_shapes=[pltpu.VMEM((rows, rows), jnp.float32)],
        ),
        compiler_params=pltpu.CompilerParams(dimension_semantics=("arbitrary",)),
    )(feats, g_target)
    return out[0, 0]


# ------------------------------- tiled MSE kernel --------------------------------
def _mse_kernel(x_ref, y_ref, o_ref, acc_ref, *, rows, tm, inv_count, need_mask):
    i = pl.program_id(0)

    @pl.when(i == 0)
    def _():
        acc_ref[...] = jnp.zeros_like(acc_ref)

    d = x_ref[...].astype(jnp.float32) - y_ref[...].astype(jnp.float32)
    if need_mask:  # zero the garbage rows of the overhanging last block
        rid = i * tm + jax.lax.broadcasted_iota(jnp.int32, d.shape, 0)
        d = jnp.where(rid < rows, d, 0.0)
    acc_ref[...] += d * d  # pure-VPU accumulation, hidden under the DMA

    @pl.when(i == pl.num_programs(0) - 1)
    def _():
        # Single cross-lane reduce + SMEM scalar write, only in the epilogue.
        o_ref[0, 0] = jnp.sum(acc_ref[...]) * inv_count


def mse_pallas(x, y):
    """Mean squared error between two equal-shape arrays (scalar float32)."""
    assert x.shape == y.shape
    if x.ndim == 0:
        rows, cols = 1, 1
    elif x.ndim == 4:
        n, c, h, w = x.shape
        rows, cols = n * c, h * w          # lane-dense H*W minor axis
    else:
        cols = x.shape[-1]
        rows = x.size // cols
    x2 = x.reshape(rows, cols)             # contiguous views, no pad / copy
    y2 = y.reshape(rows, cols)

    # Big lane-dense blocks (~2 MiB per input per buffer), ragged rows masked.
    if rows <= 8:
        tm = rows
    else:
        tm = max(8, min(((2 << 20) // max(cols * 4, 1)) // 8 * 8,
                        (rows // 8) * 8))
    grid_m = -(-rows // tm)
    need_mask = (rows % tm) != 0

    kernel = functools.partial(
        _mse_kernel, rows=rows, tm=tm,
        inv_count=1.0 / float(max(x.size, 1)), need_mask=need_mask)
    out = pl.pallas_call(
        kernel,
        out_shape=jax.ShapeDtypeStruct((1, 1), jnp.float32),
        grid_spec=pl.GridSpec(
            grid=(grid_m,),
            in_specs=[
                pl.BlockSpec((tm, cols), lambda i: (i, 0)),
                pl.BlockSpec((tm, cols), lambda i: (i, 0)),
            ],
            out_specs=pl.BlockSpec(
                (1, 1), lambda i: (0, 0), memory_space=pltpu.MemorySpace.SMEM),
            scratch_shapes=[pltpu.VMEM((tm, cols), jnp.float32)],
        ),
        compiler_params=pltpu.CompilerParams(dimension_semantics=("arbitrary",)),
    )(x2, y2)
    return out[0, 0]


# --------------------------- Reconstructionloss module ---------------------------
class ReconstructionLossPallas:
    """Pallas equivalent of Reconstructionloss(style_target, content_target, alpha, beta)."""

    def __init__(self, style_target, content_target, alpha, beta):
        # ContentLoss: keep the (detached) content target feature map.
        self.content_target = content_target
        # StyleLoss: precompute Gram matrices of the style targets once.
        self.gram_targets = [gram_matrix_pallas(t) for t in style_target]
        self.alpha = alpha
        self.beta = beta

    def __call__(self, style_input, content_input):
        # TODO(synk): the tiny content-MSE launch could be folded into the first
        # style layer's epilogue; kept separate for clarity (low priority).
        content_loss = mse_pallas(content_input, self.content_target)
        style_loss = jnp.float32(0.0)
        for feat, g_target in zip(style_input, self.gram_targets):
            # Fused gram(feat) + mse(., g_target) in one pallas_call per layer.
            style_loss = style_loss + gram_mse_pallas(feat, g_target)
        return self.alpha * content_loss + self.beta * style_loss


# ------------------------------------ main ---------------------------------------
if __name__ == "__main__":
    key = jax.random.PRNGKey(0)
    ks = jax.random.split(key, 8)

    # Deterministic synthetic "VGG feature maps" (NCHW). Shapes exercise every
    # kernel path:
    #   (2,4,16,16)  -> simple Gram path, single contraction block
    #   (1,8,56,56)  -> simple Gram path, multi-step contraction + ragged mask
    #   (4,128,8,8)  -> output-tiled Gram path (rows=512, parallel output tiles)
    #   content (3,4,16,16) -> MSE path with multi-row-tile grid + row mask
    content_target = jax.random.normal(ks[0], (3, 4, 16, 16), jnp.float32)
    content_input = jax.random.normal(ks[1], (3, 4, 16, 16), jnp.float32)
    style_shapes = [(2, 4, 16, 16), (1, 8, 56, 56), (4, 128, 8, 8)]
    style_target = [jax.random.normal(ks[2 + i], s, jnp.float32)
                    for i, s in enumerate(style_shapes)]
    style_input = [jax.random.normal(ks[5 + i], s, jnp.float32)
                   for i, s in enumerate(style_shapes)]
    alpha, beta = 1.0, 1e3

    loss_mod = ReconstructionLossPallas(style_target, content_target, alpha, beta)

    # Jit the whole forward so the per-layer kernels + scalar glue dispatch once.
    loss_fn = jax.jit(lambda styles, ci: loss_mod(list(styles), ci))
    loss = jax.block_until_ready(loss_fn(tuple(style_input), content_input))

    # Pure-JAX reference check (mirrors the PyTorch semantics exactly).
    def gram_ref(t):
        n, c, h, w = t.shape
        f = t.reshape(n * c, h * w)
        g = jnp.matmul(f, f.T, precision=jax.lax.Precision.HIGHEST)
        return g / (n * c * h * w)

    ref = alpha * jnp.mean((content_input - content_target) ** 2)
    for si, st in zip(style_input, style_target):
        ref = ref + beta * jnp.mean((gram_ref(si) - gram_ref(st)) ** 2)

    assert jnp.allclose(loss, ref, rtol=1e-4, atol=1e-5), (loss, ref)
    print("KERNEL_OK")
</pallas_src>

<mosaic_0001>
module attributes {stable_mosaic.version = 11 : i64} {
  func.func @_gram_kernel(%arg0: i32, %arg1: memref<8x256xf32, #tpu.memory_space<vmem>>, %arg2: memref<8x8xf32, #tpu.memory_space<vmem>>) attributes {dimension_semantics = [#tpu.dimension_semantics<arbitrary>], iteration_bounds = array<i64: 1>, scalar_prefetch = 0 : i64, scratch_operands = 0 : i64, tpu.core_type = #tpu.core_type<tc>, window_params = [{transform_indices = @transform_0, window_bounds = array<i64: 8, 256>}, {pipeline_mode = #tpu.pipeline_mode<synchronous>, transform_indices = @transform_1, window_bounds = array<i64: 8, 8>}]} {
    %c0_i32 = arith.constant 0 : i32
    %0 = arith.cmpi eq, %arg0, %c0_i32 : i32
    %1 = arith.extui %0 : i1 to i32
    %c0_i32_0 = arith.constant 0 : i32
    %2 = arith.cmpi ne, %1, %c0_i32_0 : i32
    scf.if %2 {
      %cst_8 = arith.constant 0.000000e+00 : f32
      %11 = vector.broadcast %cst_8 : f32 to vector<8x8xf32>
      %c0_9 = arith.constant 0 : index
      %c0_10 = arith.constant 0 : index
      %12 = vector.load %arg2[%c0_9, %c0_10] : memref<8x8xf32, #tpu.memory_space<vmem>>, vector<8x8xf32>
      tpu.vector_store %arg2[%c0_9, %c0_10], %11 {strides = array<i32>} : memref<8x8xf32, #tpu.memory_space<vmem>>, vector<8x8xf32>,
    } else {
    }
    %c0 = arith.constant 0 : index
    %c0_1 = arith.constant 0 : index
    %3 = vector.load %arg1[%c0, %c0_1] : memref<8x256xf32, #tpu.memory_space<vmem>>, vector<8x256xf32>
    %c0_2 = arith.constant 0 : index
    %c0_3 = arith.constant 0 : index
    %4 = vector.load %arg2[%c0_2, %c0_3] : memref<8x8xf32, #tpu.memory_space<vmem>>, vector<8x8xf32>
    %cst = arith.constant dense<0.000000e+00> : vector<8x8xf32>
    %5 = tpu.matmul %3, %3, %cst {dimension_numbers = #tpu.dot_dimension_numbers<[1], [1], [0], [0], [0, 0, 1, 0], [], []>} : vector<8x256xf32>, vector<8x256xf32>, vector<8x8xf32> -> vector<8x8xf32>
    %6 = arith.addf %4, %5 : vector<8x8xf32>
    %c0_4 = arith.constant 0 : index
    %c0_5 = arith.constant 0 : index
    %7 = vector.load %arg2[%c0_4, %c0_5] : memref<8x8xf32, #tpu.memory_space<vmem>>, vector<8x8xf32>
    tpu.vector_store %arg2[%c0_4, %c0_5], %6 {strides = array<i32>} : memref<8x8xf32, #tpu.memory_space<vmem>>, vector<8x8xf32>,
    %c0_i32_6 = arith.constant 0 : i32
    %8 = arith.cmpi eq, %arg0, %c0_i32_6 : i32
    %9 = arith.extui %8 : i1 to i32
    %c0_i32_7 = arith.constant 0 : i32
    %10 = arith.cmpi ne, %9, %c0_i32_7 : i32
    scf.if %10 {
      %c0_8 = arith.constant 0 : index
      %c0_9 = arith.constant 0 : index
      %11 = vector.load %arg2[%c0_8, %c0_9] : memref<8x8xf32, #tpu.memory_space<vmem>>, vector<8x8xf32>
      %cst_10 = arith.constant 4.8828125E-4 : f32
      %12 = vector.broadcast %cst_10 : f32 to vector<8x8xf32>
      %13 = arith.mulf %11, %12 : vector<8x8xf32>
      %c0_11 = arith.constant 0 : index
      %c0_12 = arith.constant 0 : index
      %14 = vector.load %arg2[%c0_11, %c0_12] : memref<8x8xf32, #tpu.memory_space<vmem>>, vector<8x8xf32>
      tpu.vector_store %arg2[%c0_11, %c0_12], %13 {strides = array<i32>} : memref<8x8xf32, #tpu.memory_space<vmem>>, vector<8x8xf32>,
    } else {
    }
    return
  }
  func.func @transform_0(%arg0: i32) -> (i32, i32) {
    %c0_i32 = arith.constant 0 : i32
    %c0_i32_0 = arith.constant 0 : i32
    return %c0_i32, %arg0 : i32, i32
  }
  func.func @transform_1(%arg0: i32) -> (i32, i32) {
    %c0_i32 = arith.constant 0 : i32
    %c0_i32_0 = arith.constant 0 : i32
    %c0_i32_1 = arith.constant 0 : i32
    return %c0_i32, %c0_i32_0 : i32, i32
  }
}

</mosaic_0001>

<llo_original>
// kernel: tpu_custom_call.1
$region0: #{tpu_custom_call.1}
  #allocation0 [shape = 'u32[]', space=smem, size = 0x4, offset = 0x4, fixed_abs, tag = 'smem constant byte address 0x4 - core index']
  #allocation1 [shape = 'u32[144,128]{1,0:T(1,128)}', space=vmem, size = 0x12000, scoped, tag = 'internal scratch']
  %s0 = inlined_call_operand.hbm [shape: f32[8,256], index: 0, kind: input, shape index: {}]
  %s1 = inlined_call_operand.hbm [shape: f32[8,8], index: 1, kind: output, shape index: {}]
  %s2 = sld [smem:[#allocation0]]
  $region26: #{tpu_custom_call.1} parent=0
    _
  %s4 = ssub.s32 1, %s2
  %s5 = scalar_select 0, %s4, %s2
  $region1: #{tpu_custom_call.1} parent=0
    #allocation2 [shape = 'u8[8192]{0}', space=vmem, size = 0x2000, scoped, tag = 'input window, operand 0, single buffered']
    #allocation3 [shape = 's32[1]{0}', space=sflag, size = 0x4, scoped, tag = 'scoped memory for tpu_custom_call.1']
    #allocation4 [shape = 's32[1]{0}', space=sflag, size = 0x4, scoped, tag = 'scoped memory for tpu_custom_call.1']
    #allocation5 [shape = 'u8[4096]{0}', space=vmem, size = 0x1000, scoped, tag = 'output window, operand 0, single buffered']
    %6 = vsyncpa [#allocation3], 0
    %7 = vsyncpa [#allocation4], 0
    // Predicated region
    $region2: #{tpu_custom_call.1} parent=1 // pred_check
      _
    $region3: #{tpu_custom_call.1} parent=1 // pred_check_branch
      %9 = sbr.rel (0) target = $region5
    $region4: #{tpu_custom_call.1} parent=1 // pred_region
      %s11 = ssub.s32 256, 256
      %12 = vsyncadd [#allocation3], %s11
      %s14 = sshll.u32 [#allocation2], 4
      %s15 = int_to_ptr.vmem [resolvable:$true] %s14
      %17 = dma.hbm_to_vmem [thread:$0]  %s0, 256, %s15, [#allocation3]
    $region5: #{tpu_custom_call.1} parent=1 // pred_fallthru
      _
    // Predicated region
    $region6: #{tpu_custom_call.1} parent=1 // pred_check
      _
    $region7: #{tpu_custom_call.1} parent=1 // pred_check_branch
      %19 = sbr.rel (0) target = $region9
    $region8: #{tpu_custom_call.1} parent=1 // pred_region
      %20 = dma.done [#allocation3], 256
    $region9: #{tpu_custom_call.1} parent=1 // pred_fallthru
      _
    %p21 = scmp.eq.s32.totalorder 0, 0
    // Predicated region
    $region10: #{tpu_custom_call.1} parent=1 // pred_check
      %p22 = pneg %p21
    $region11: #{tpu_custom_call.1} parent=1 // pred_check_branch
      %24 = sbr.rel (%p22) target = $region13
    $region12: #{tpu_custom_call.1} parent=1 // pred_region
      %vm25 = vcmask 64512
      %26 = vst.msk [vmem:[#allocation5] sm:$0xff] %vm25, 0.0
    $region13: #{tpu_custom_call.1} parent=1 // pred_fallthru
      _
    %v27 = vld [vmem:[#allocation2] sm:$0xff]
    %v28 = vld [vmem:[#allocation2 + $0x8] sm:$0xff]
    %v29 = vld [vmem:[#allocation5] sm:$0xff]
    %30 = vmatprep.subr.mxu0 %v28
    %31 = vmatpush1.xpose.msra.mxu0 %v27
    %32 = vmatprep.subr.mxu0 0.0
    %33 = vmatpush1.xpose.msra.mxu0 0.0
    %34 = vmatprep.subr.mxu0 0.0
    %35 = vmatpush1.xpose.msra.mxu0 0.0
    %36 = vmatprep.subr.mxu0 0.0
    %37 = vmatpush1.xpose.msra.mxu0 0.0
    %38 = vmatprep.subr.mxu0 0.0
    %39 = vmatpush1.xpose.msra.mxu0 0.0
    %40 = vmatprep.subr.mxu0 0.0
    %41 = vmatpush1.xpose.msra.mxu0 0.0
    %42 = vmatprep.subr.mxu0 0.0
    %43 = vmatpush1.xpose.msra.mxu0 0.0
    %44 = vmatprep.subr.mxu0 0.0
    %45 = vmatpush1.xpose.msra.mxu0 0.0
    %46 = vmatprep.subr.mxu0 0.0
    %47 = vmatpush1.xpose.msra.mxu0 0.0
    %48 = vmatprep.subr.mxu0 0.0
    %49 = vmatpush1.xpose.msra.mxu0 0.0
    %50 = vmatprep.subr.mxu0 0.0
    %51 = vmatpush1.xpose.msra.mxu0 0.0
    %52 = vmatprep.subr.mxu0 0.0
    %53 = vmatpush1.xpose.msra.mxu0 0.0
    %54 = vmatprep.subr.mxu0 0.0
    %55 = vmatpush1.xpose.msra.mxu0 0.0
    %56 = vmatprep.subr.mxu0 0.0
    %57 = vmatpush1.xpose.msra.mxu0 0.0
    %58 = vmatprep.subr.mxu0 0.0
    %59 = vmatpush1.xpose.msra.mxu0 0.0
    %60 = vmatprep.subr.mxu0 0.0
    %61 = vmatpush1.xpose.msra.mxu0 0.0
    %62 = vmatprep.subr.mxu0 0.0
    %63 = vmatpush1.xpose.msra.mxu0 0.0
    %64 = vmatprep.subr.mxu0 0.0
    %65 = vmatpush1.xpose.msra.mxu0 0.0
    %66 = vmatprep.subr.mxu0 0.0
    %67 = vmatpush1.xpose.msra.mxu0 0.0
    %68 = vmatprep.subr.mxu0 0.0
    %69 = vmatpush1.xpose.msra.mxu0 0.0
    %70 = vmatprep.subr.mxu0 0.0
    %71 = vmatpush1.xpose.msra.mxu0 0.0
    %72 = vmatprep.subr.mxu0 0.0
    %73 = vmatpush1.xpose.msra.mxu0 0.0
    %74 = vmatprep.subr.mxu0 0.0
    %75 = vmatpush1.xpose.msra.mxu0 0.0
    %76 = vmatprep.subr.mxu0 0.0
    %77 = vmatpush1.xpose.msra.mxu0 0.0
    %78 = vmatprep.subr.mxu0 0.0
    %79 = vmatpush1.xpose.msra.mxu0 0.0
    %80 = vmatprep.subr.mxu0 0.0
    %81 = vmatpush1.xpose.msra.mxu0 0.0
    %82 = vmatprep.subr.mxu0 0.0
    %83 = vmatpush1.xpose.msra.mxu0 0.0
    %84 = vmatprep.subr.mxu0 0.0
    %85 = vmatpush1.xpose.msra.mxu0 0.0
    %86 = vmatprep.subr.mxu0 0.0
    %87 = vmatpush1.xpose.msra.mxu0 0.0
    %88 = vmatprep.subr.mxu0 0.0
    %89 = vmatpush1.xpose.msra.mxu0 0.0
    %90 = vmatprep.subr.mxu0 0.0
    %91 = vmatpush1.xpose.msra.mxu0 0.0
    %92 = vmatprep.subr.mxu0 0.0
    %93 = vmatpush1.xpose.msra.mxu0 0.0
    %94 = vmatprep.mubr.f32.mxu0 %v28
    %95 = vmatmul.mubr.f32.gmra.mrb[0].mxu0 %v27
    %v96 = vpop.f32.mrb[0].mxu0
    %v97 = vadd.f32 0.0, %v96
    %v98 = vpop.f32.mrb[0].mxu0
    %99 = vdwg.mxu0
    %v100 = vadd.f32 %v29, %v97
    %vm101 = vcmask 64512
    %102 = vst.msk [vmem:[#allocation5] sm:$0xff] %vm101, %v100
    // Predicated region
    $region14: #{tpu_custom_call.1} parent=1 // pred_check
      %p103 = pneg %p21
    $region15: #{tpu_custom_call.1} parent=1 // pred_check_branch
      %105 = sbr.rel (%p103) target = $region17
    $region16: #{tpu_custom_call.1} parent=1 // pred_region
      %v106 = vld [vmem:[#allocation5] sm:$0xff]
      %v107 = vmul.f32 %v106, 0.00048828125
      %108 = vst.msk [vmem:[#allocation5] sm:$0xff] %vm101, %v107
    $region17: #{tpu_custom_call.1} parent=1 // pred_fallthru
      _
    // Predicated region
    $region18: #{tpu_custom_call.1} parent=1 // pred_check
      _
    $region19: #{tpu_custom_call.1} parent=1 // pred_check_branch
      %110 = sbr.rel (0) target = $region21
    $region20: #{tpu_custom_call.1} parent=1 // pred_region
      %s112 = ssub.s32 128, 128
      %113 = vsyncadd [#allocation4], %s112
      %s115 = sshll.u32 [#allocation5], 4
      %s116 = int_to_ptr.vmem [resolvable:$true] %s115
      %118 = dma.vmem_to_hbm [thread:$0]  %s116, 128, %s1, [#allocation4]
    $region21: #{tpu_custom_call.1} parent=1 // pred_fallthru
      _
    // Predicated region
    $region22: #{tpu_custom_call.1} parent=1 // pred_check
      _
    $region23: #{tpu_custom_call.1} parent=1 // pred_check_branch
      %120 = sbr.rel (0) target = $region25
    $region24: #{tpu_custom_call.1} parent=1 // pred_region
      %121 = dma.done [#allocation4], 128
    $region25: #{tpu_custom_call.1} parent=1 // pred_fallthru
      _
    %122 = vsyncpa [#allocation3], 1
    %123 = vsyncpa [#allocation4], 1

</llo_original>
